<compile_context>
chip_gen: v5e
topology: v5e:2x2
jax: 0.10.0
libtpu: 0.0.40
codegen_flags: <defaults>
</compile_context>

<pallas_src>
import functools
import math

import jax
import jax.numpy as jnp
from jax.experimental import pallas as pl
from jax.experimental.pallas import tpu as pltpu


def _round_up(a, b):
    return (a + b - 1) // b * b


def _pick_tile(total, target, min_tiles=1):
    """Largest multiple-of-128 divisor of `total` (itself a multiple of 128) that
    is <= target and leaves at least `min_tiles` grid steps when possible."""
    m = total // 128
    best = 128
    for d in range(1, m + 1):
        if m % d != 0:
            continue
        t = 128 * d
        if t <= target and (m // d) >= min_tiles:
            best = max(best, t)
    return best


# ---------------------------------------------------------------------------
# Kernel 1: support = X @ W   (small GEMM, tiled over rows, W fully resident)
# ---------------------------------------------------------------------------
def _support_kernel(x_ref, w_ref, o_ref):
    o_ref[...] = jnp.dot(
        x_ref[...], w_ref[...], preferred_element_type=jnp.float32
    ).astype(o_ref.dtype)


# ---------------------------------------------------------------------------
# Kernel 2: out = adj @ support + bias
#   grid = (row tiles, reduction tiles). adj is streamed per tile (cast to bf16
#   in-kernel); support is a single resident VMEM block sliced with pl.ds; f32
#   accumulator; bias added on the final reduction step only.
# ---------------------------------------------------------------------------
def _adj_matmul_kernel(adj_ref, sup_ref, b_ref, o_ref, acc_ref, *, tk):
    k = pl.program_id(1)

    @pl.when(k == 0)
    def _init():
        acc_ref[...] = jnp.zeros_like(acc_ref)

    a_tile = adj_ref[...].astype(jnp.bfloat16)            # per-tile cast, no HBM copy
    off = pl.multiple_of(k * tk, 128)
    s_tile = sup_ref[pl.ds(off, tk), :]                    # slice of resident support
    acc_ref[...] += jnp.dot(a_tile, s_tile, preferred_element_type=jnp.float32)

    @pl.when(k == pl.num_programs(1) - 1)
    def _finalize():
        o_ref[...] = (acc_ref[...] + b_ref[...]).astype(o_ref.dtype)


def graph_convolution_g(adj, x, weight, bias, *, tm=512, tk=1024):
    """GCN forward: adj @ (x @ weight) + bias.

    adj: (N, N) dense adjacency, x: (N, in_f), weight: (in_f, out_f),
    bias: (out_f,) or None.  Returns (N, out_f) in x.dtype.
    """
    n, in_f = x.shape
    out_f = weight.shape[1]
    out_dtype = x.dtype

    # ---- padded, lane-dense / MXU-friendly shapes -------------------------
    n_p = _round_up(n, 128)
    in_fp = _round_up(in_f, 128)
    out_fp = _round_up(out_f, 128)

    tm_eff = _pick_tile(n_p, tm, min_tiles=2)   # >=2 row tiles feeds both v7x TCs
    tk_eff = _pick_tile(n_p, tk, min_tiles=1)
    ts_eff = _pick_tile(n_p, 512, min_tiles=1)  # support-kernel row tile

    # adj stays in HBM in its original dtype: no padded bf16 copy. Pad (zeros)
    # only when N is not already a multiple of 128.
    adj_in = adj if n_p == n else jnp.pad(adj, ((0, n_p - n), (0, n_p - n)))
    adj_itemsize = jnp.dtype(adj_in.dtype).itemsize

    # x / weight are small relative to adj; pad + pre-cast to bf16 in one copy.
    x_p = jnp.zeros((n_p, in_fp), jnp.bfloat16).at[:n, :in_f].set(
        x.astype(jnp.bfloat16))
    w_p = jnp.zeros((in_fp, out_fp), jnp.bfloat16).at[:in_f, :out_f].set(
        weight.astype(jnp.bfloat16))
    if bias is None:
        b_p = jnp.zeros((1, out_fp), jnp.float32)
    else:
        b_p = jnp.zeros((1, out_fp), jnp.float32).at[0, :out_f].set(
            bias.astype(jnp.float32))

    # ---- support = X @ W (computed once, bf16 output) ----------------------
    support = pl.pallas_call(
        _support_kernel,
        out_shape=jax.ShapeDtypeStruct((n_p, out_fp), jnp.bfloat16),
        grid=(n_p // ts_eff,),
        in_specs=[
            pl.BlockSpec((ts_eff, in_fp), lambda i: (i, 0)),
            pl.BlockSpec((in_fp, out_fp), lambda i: (0, 0)),
        ],
        out_specs=pl.BlockSpec((ts_eff, out_fp), lambda i: (i, 0)),
        compiler_params=pltpu.CompilerParams(
            dimension_semantics=("parallel",)),
    )(x_p, w_p)

    # ---- out = adj @ support + bias ----------------------------------------
    grid = (n_p // tm_eff, n_p // tk_eff)

    flops = 2 * n_p * n_p * out_fp
    bytes_accessed = (
        n_p * n_p * adj_itemsize                          # adj streamed once
        + n_p * out_fp * 2                                # support read once (resident)
        + n_p * out_fp * jnp.dtype(out_dtype).itemsize    # output write
        + out_fp * 4                                      # bias
    )

    # VMEM footprint: double-buffered adj tile + resident support (2 bufs) +
    # f32 accumulator + double-buffered output tile + bias.
    vmem_need = (
        2 * tm_eff * tk_eff * adj_itemsize
        + 2 * n_p * out_fp * 2
        + tm_eff * out_fp * 4
        + 2 * tm_eff * out_fp * jnp.dtype(out_dtype).itemsize
        + 2 * out_fp * 4
    )
    vmem_limit = int(min(48 * 1024 * 1024, max(32 * 1024 * 1024, 2 * vmem_need)))

    kernel = functools.partial(_adj_matmul_kernel, tk=tk_eff)
    out_p = pl.pallas_call(
        kernel,
        out_shape=jax.ShapeDtypeStruct((n_p, out_fp), out_dtype),
        grid=grid,
        in_specs=[
            pl.BlockSpec((tm_eff, tk_eff), lambda i, k: (i, k)),   # adj, streamed
            pl.BlockSpec((n_p, out_fp), lambda i, k: (0, 0)),      # support, resident
            pl.BlockSpec((1, out_fp), lambda i, k: (0, 0)),        # bias, resident
        ],
        out_specs=pl.BlockSpec((tm_eff, out_fp), lambda i, k: (i, 0)),
        scratch_shapes=[pltpu.VMEM((tm_eff, out_fp), jnp.float32)],
        compiler_params=pltpu.CompilerParams(
            dimension_semantics=("parallel", "arbitrary"),
            vmem_limit_bytes=vmem_limit,
        ),
        cost_estimate=pl.CostEstimate(
            flops=flops, transcendentals=0, bytes_accessed=bytes_accessed),
    )(adj_in, support, b_p)

    return out_p[:n, :out_f]


def _make_inputs(key, n, in_f, out_f):
    k_x, k_adj, k_w, k_b = jax.random.split(key, 4)
    # reset_parameters(): uniform(-stdv, stdv), stdv = 1/sqrt(out_features)
    stdv = 1.0 / math.sqrt(out_f)
    weight = jax.random.uniform(k_w, (in_f, out_f), jnp.float32, -stdv, stdv)
    bias = jax.random.uniform(k_b, (out_f,), jnp.float32, -stdv, stdv)
    x = jax.random.normal(k_x, (n, in_f), jnp.float32)
    # Row-normalized random adjacency (dense stand-in for the sparse adj).
    adj_raw = (jax.random.uniform(k_adj, (n, n)) > 0.7).astype(jnp.float32)
    adj_raw = adj_raw + jnp.eye(n, dtype=jnp.float32)
    adj = adj_raw / jnp.sum(adj_raw, axis=1, keepdims=True)
    return adj, x, weight, bias


if __name__ == "__main__":
    key = jax.random.PRNGKey(0)
    k1, k2 = jax.random.split(key)

    # Case 1: shapes implied by the module's typical use (small GCN layer).
    N, IN_F, OUT_F = 64, 32, 16
    adj, x, weight, bias = _make_inputs(k1, N, IN_F, OUT_F)
    out = jax.block_until_ready(graph_convolution_g(adj, x, weight, bias))
    ref = adj @ (x @ weight) + bias
    assert out.shape == (N, OUT_F)
    # bf16 MXU inputs with f32 accumulation -> loosened tolerance vs f32 ref.
    assert jnp.allclose(out, ref, atol=3e-2, rtol=3e-2), "mismatch vs reference (case 1)"

    # Case 2: non-128-multiple shapes + bias=None to exercise padding paths and
    # the multi-tile (row and reduction) grid.
    N2, IN_F2, OUT_F2 = 200, 48, 96
    adj2, x2, weight2, _ = _make_inputs(k2, N2, IN_F2, OUT_F2)
    out2 = jax.block_until_ready(graph_convolution_g(adj2, x2, weight2, None))
    ref2 = adj2 @ (x2 @ weight2)
    assert out2.shape == (N2, OUT_F2)
    assert jnp.allclose(out2, ref2, atol=3e-2, rtol=3e-2), "mismatch vs reference (case 2)"

    print("KERNEL_OK")
</pallas_src>

<mosaic_0001>
module attributes {stable_mosaic.version = 11 : i64} {
  func.func @_support_kernel(%arg0: i32, %arg1: memref<128x128xbf16, #tpu.memory_space<vmem>>, %arg2: memref<128x128xbf16, #tpu.memory_space<vmem>>, %arg3: memref<128x128xbf16, #tpu.memory_space<vmem>>) attributes {dimension_semantics = [#tpu.dimension_semantics<parallel>], iteration_bounds = array<i64: 1>, scalar_prefetch = 0 : i64, scratch_operands = 0 : i64, tpu.core_type = #tpu.core_type<tc>, window_params = [{transform_indices = @transform_0, window_bounds = array<i64: 128, 128>}, {pipeline_mode = #tpu.pipeline_mode<synchronous>, transform_indices = @transform_1, window_bounds = array<i64: 128, 128>}, {transform_indices = @transform_2, window_bounds = array<i64: 128, 128>}]} {
    %c0 = arith.constant 0 : index
    %c0_0 = arith.constant 0 : index
    %0 = vector.load %arg1[%c0, %c0_0] : memref<128x128xbf16, #tpu.memory_space<vmem>>, vector<128x128xbf16>
    %c0_1 = arith.constant 0 : index
    %c0_2 = arith.constant 0 : index
    %1 = vector.load %arg2[%c0_1, %c0_2] : memref<128x128xbf16, #tpu.memory_space<vmem>>, vector<128x128xbf16>
    %cst = arith.constant dense<0.000000e+00> : vector<128x128xf32>
    %2 = tpu.matmul %0, %1, %cst {dimension_numbers = #tpu.dot_dimension_numbers<[1], [0], [0], [1], [0, 0, 1, 1], [], []>} : vector<128x128xbf16>, vector<128x128xbf16>, vector<128x128xf32> -> vector<128x128xf32>
    %3 = arith.truncf %2 : vector<128x128xf32> to vector<128x128xbf16>
    %c0_3 = arith.constant 0 : index
    %c0_4 = arith.constant 0 : index
    %4 = vector.load %arg3[%c0_3, %c0_4] : memref<128x128xbf16, #tpu.memory_space<vmem>>, vector<128x128xbf16>
    tpu.vector_store %arg3[%c0_3, %c0_4], %3 {strides = array<i32>} : memref<128x128xbf16, #tpu.memory_space<vmem>>, vector<128x128xbf16>,
    return
  }
  func.func @transform_0(%arg0: i32) -> (i32, i32) {
    %c0_i32 = arith.constant 0 : i32
    %c0_i32_0 = arith.constant 0 : i32
    return %arg0, %c0_i32 : i32, i32
  }
  func.func @transform_1(%arg0: i32) -> (i32, i32) {
    %c0_i32 = arith.constant 0 : i32
    %c0_i32_0 = arith.constant 0 : i32
    %c0_i32_1 = arith.constant 0 : i32
    return %c0_i32, %c0_i32_0 : i32, i32
  }
  func.func @transform_2(%arg0: i32) -> (i32, i32) {
    %c0_i32 = arith.constant 0 : i32
    %c0_i32_0 = arith.constant 0 : i32
    return %arg0, %c0_i32 : i32, i32
  }
}

</mosaic_0001>

<llo_original>
// kernel: tpu_custom_call.1
$region0: #{tpu_custom_call.1}
  #allocation0 [shape = 'u32[]', space=smem, size = 0x4, offset = 0x4, fixed_abs, tag = 'smem constant byte address 0x4 - core index']
  #allocation1 [shape = 'u32[72,128]{1,0:T(1,128)}', space=vmem, size = 0x9000, scoped, tag = 'internal scratch']
  %s0 = inlined_call_operand.hbm [shape: bf16[128,128], index: 0, kind: input, shape index: {}]
  %s1 = inlined_call_operand.hbm [shape: bf16[128,128], index: 1, kind: input, shape index: {}]
  %s2 = inlined_call_operand.hbm [shape: bf16[128,128], index: 2, kind: output, shape index: {}]
  %s3 = sld [smem:[#allocation0]]
  $region26: #{tpu_custom_call.1} parent=0
    _
  %s5 = ssub.s32 1, %s3
  %s6 = scalar_select 0, %s5, %s3
  $region1: #{tpu_custom_call.1} parent=0
    #allocation2 [shape = 'u8[32768]{0}', space=vmem, size = 0x8000, scoped, tag = 'input window, operand 0, single buffered']
    #allocation3 [shape = 's32[1]{0}', space=sflag, size = 0x4, scoped, tag = 'scoped memory for tpu_custom_call.1']
    #allocation4 [shape = 's32[1]{0}', space=sflag, size = 0x4, scoped, tag = 'scoped memory for tpu_custom_call.1']
    #allocation5 [shape = 'u8[32768]{0}', space=vmem, size = 0x8000, scoped, tag = 'input window, operand 1, single buffered']
    #allocation6 [shape = 's32[1]{0}', space=sflag, size = 0x4, scoped, tag = 'scoped memory for tpu_custom_call.1']
    #allocation7 [shape = 'u8[32768]{0}', space=vmem, size = 0x8000, scoped, tag = 'output window, operand 0, single buffered']
    %7 = vsyncpa [#allocation3], 0
    %8 = vsyncpa [#allocation6], 0
    %9 = vsyncpa [#allocation4], 0
    // Predicated region
    $region2: #{tpu_custom_call.1} parent=1 // pred_check
      _
    $region3: #{tpu_custom_call.1} parent=1 // pred_check_branch
      %11 = sbr.rel (0) target = $region5
    $region4: #{tpu_custom_call.1} parent=1 // pred_region
      %13 = vsyncadd [#allocation3], 0
      %s14 = sshll.u32 %s0, 4
      %s15 = int_to_ptr.hbm [resolvable:$true] %s14
      %s16 = sshll.u32 [#allocation2], 4
      %s17 = int_to_ptr.vmem [resolvable:$true] %s16
      %22 = dma.hbm_to_vmem [thread:$0]  %s15, 1024, %s17, [#allocation3], 64, 64, 4
    $region5: #{tpu_custom_call.1} parent=1 // pred_fallthru
      _
    // Predicated region
    $region6: #{tpu_custom_call.1} parent=1 // pred_check
      _
    $region7: #{tpu_custom_call.1} parent=1 // pred_check_branch
      %24 = sbr.rel (0) target = $region9
    $region8: #{tpu_custom_call.1} parent=1 // pred_region
      %26 = vsyncadd [#allocation6], 0
      %s27 = sshll.u32 %s1, 4
      %s28 = int_to_ptr.hbm [resolvable:$true] %s27
      %s29 = sshll.u32 [#allocation5], 4
      %s30 = int_to_ptr.vmem [resolvable:$true] %s29
      %35 = dma.hbm_to_vmem [thread:$0]  %s28, 1024, %s30, [#allocation6], 64, 64, 4
    $region9: #{tpu_custom_call.1} parent=1 // pred_fallthru
      _
    // Predicated region
    $region10: #{tpu_custom_call.1} parent=1 // pred_check
      _
    $region11: #{tpu_custom_call.1} parent=1 // pred_check_branch
      %37 = sbr.rel (0) target = $region13
    $region12: #{tpu_custom_call.1} parent=1 // pred_region
      %39 = dma.done [#allocation3], 1024
    $region13: #{tpu_custom_call.1} parent=1 // pred_fallthru
      _
    // Predicated region
    $region14: #{tpu_custom_call.1} parent=1 // pred_check
      _
    $region15: #{tpu_custom_call.1} parent=1 // pred_check_branch
      %41 = sbr.rel (0) target = $region17
    $region16: #{tpu_custom_call.1} parent=1 // pred_region
      %43 = dma.done [#allocation6], 1024
    $region17: #{tpu_custom_call.1} parent=1 // pred_fallthru
      _
    %v44 = vld [vmem:[#allocation2] sm:$0xf]
    %v45 = vld [vmem:[#allocation2 + $0x4] sm:$0xf]
    %v46 = vld [vmem:[#allocation2 + $0x8] sm:$0xf]
    %v47 = vld [vmem:[#allocation2 + $0xc] sm:$0xf]
    %v48 = vld [vmem:[#allocation2 + $0x10] sm:$0xf]
    %v49 = vld [vmem:[#allocation2 + $0x14] sm:$0xf]
    %v50 = vld [vmem:[#allocation2 + $0x18] sm:$0xf]
    %v51 = vld [vmem:[#allocation2 + $0x1c] sm:$0xf]
    %v52 = vld [vmem:[#allocation2 + $0x20] sm:$0xf]
    %v53 = vld [vmem:[#allocation2 + $0x24] sm:$0xf]
    %v54 = vld [vmem:[#allocation2 + $0x28] sm:$0xf]
    %v55 = vld [vmem:[#allocation2 + $0x2c] sm:$0xf]
    %v56 = vld [vmem:[#allocation2 + $0x30] sm:$0xf]
    %v57 = vld [vmem:[#allocation2 + $0x34] sm:$0xf]
    %v58 = vld [vmem:[#allocation2 + $0x38] sm:$0xf]
    %v59 = vld [vmem:[#allocation2 + $0x3c] sm:$0xf]
    %v60 = vld [vmem:[#allocation5] sm:$0xf]
    %v61 = vld [vmem:[#allocation5 + $0x4] sm:$0xf]
    %v62 = vld [vmem:[#allocation5 + $0x8] sm:$0xf]
    %v63 = vld [vmem:[#allocation5 + $0xc] sm:$0xf]
    %v64 = vld [vmem:[#allocation5 + $0x10] sm:$0xf]
    %v65 = vld [vmem:[#allocation5 + $0x14] sm:$0xf]
    %v66 = vld [vmem:[#allocation5 + $0x18] sm:$0xf]
    %v67 = vld [vmem:[#allocation5 + $0x1c] sm:$0xf]
    %v68 = vld [vmem:[#allocation5 + $0x20] sm:$0xf]
    %v69 = vld [vmem:[#allocation5 + $0x24] sm:$0xf]
    %v70 = vld [vmem:[#allocation5 + $0x28] sm:$0xf]
    %v71 = vld [vmem:[#allocation5 + $0x2c] sm:$0xf]
    %v72 = vld [vmem:[#allocation5 + $0x30] sm:$0xf]
    %v73 = vld [vmem:[#allocation5 + $0x34] sm:$0xf]
    %v74 = vld [vmem:[#allocation5 + $0x38] sm:$0xf]
    %v75 = vld [vmem:[#allocation5 + $0x3c] sm:$0xf]
    %v92 = vunpack.c.l.b16 %v44
    %v93 = vunpack.c.l.b16 %v45
    %v94 = vunpack.c.l.b16 %v46
    %v95 = vunpack.c.l.b16 %v47
    %v96 = vunpack.c.l.b16 %v48
    %v97 = vunpack.c.l.b16 %v49
    %v98 = vunpack.c.l.b16 %v50
    %v99 = vunpack.c.l.b16 %v51
    %v100 = vunpack.c.l.b16 %v52
    %v101 = vunpack.c.l.b16 %v53
    %v102 = vunpack.c.l.b16 %v54
    %v103 = vunpack.c.l.b16 %v55
    %v104 = vunpack.c.l.b16 %v56
    %v105 = vunpack.c.l.b16 %v57
    %v106 = vunpack.c.l.b16 %v58
    %v107 = vunpack.c.l.b16 %v59
    %v108 = vpack.c.b16 %v93, %v92
    %v109 = vpack.c.b16 %v95, %v94
    %v110 = vpack.c.b16 %v97, %v96
    %v111 = vpack.c.b16 %v99, %v98
    %v112 = vpack.c.b16 %v101, %v100
    %v113 = vpack.c.b16 %v103, %v102
    %v114 = vpack.c.b16 %v105, %v104
    %v115 = vpack.c.b16 %v107, %v106
    %v140 = vunpack.c.l.b16 %v60
    %v141 = vunpack.c.l.b16 %v61
    %v142 = vunpack.c.l.b16 %v62
    %v143 = vunpack.c.l.b16 %v63
    %v144 = vunpack.c.l.b16 %v64
    %v145 = vunpack.c.l.b16 %v65
    %v146 = vunpack.c.l.b16 %v66
    %v147 = vunpack.c.l.b16 %v67
    %v148 = vunpack.c.l.b16 %v68
    %v149 = vunpack.c.l.b16 %v69
    %v150 = vunpack.c.l.b16 %v70
    %v151 = vunpack.c.l.b16 %v71
    %v152 = vunpack.c.l.b16 %v72
    %v153 = vunpack.c.l.b16 %v73
    %v154 = vunpack.c.l.b16 %v74
    %v155 = vunpack.c.l.b16 %v75
    %v156 = vpack.c.b16 %v141, %v140
    %v157 = vpack.c.b16 %v143, %v142
    %v158 = vpack.c.b16 %v145, %v144
    %v159 = vpack.c.b16 %v147, %v146
    %v160 = vpack.c.b16 %v149, %v148
    %v161 = vpack.c.b16 %v151, %v150
    %v162 = vpack.c.b16 %v153, %v152
    %v163 = vpack.c.b16 %v155, %v154
    %172 = vmatpush.bf16.msra.mxu0 %v163
    %173 = vmatpush.bf16.msra.mxu0 %v162
    %174 = vmatpush.bf16.msra.mxu0 %v161
    %175 = vmatpush.bf16.msra.mxu0 %v160
    %176 = vmatpush.bf16.msra.mxu0 %v159
    %177 = vmatpush.bf16.msra.mxu0 %v158
    %178 = vmatpush.bf16.msra.mxu0 %v157
    %179 = vmatpush.bf16.msra.mxu0 %v156
    %180 = vmatmul.bf16.gmra.mxu0 %v108
    %v181 = vpop.f32.mrf.mxu0
    %v182 = vadd.f32 0.0, %v181
    %v183 = vpop.f32.mrf.mxu0
    %v184 = vadd.f32 0.0, %v183
    %185 = vmatmul.bf16.gmra.mxu0 %v109
    %v186 = vpop.f32.mrf.mxu0
    %v187 = vadd.f32 0.0, %v186
    %v188 = vpop.f32.mrf.mxu0
    %v189 = vadd.f32 0.0, %v188
    %190 = vmatmul.bf16.gmra.mxu0 %v110
    %v191 = vpop.f32.mrf.mxu0
    %v192 = vadd.f32 0.0, %v191
    %v193 = vpop.f32.mrf.mxu0
    %v194 = vadd.f32 0.0, %v193
    %195 = vmatmul.bf16.gmra.mxu0 %v111
    %v196 = vpop.f32.mrf.mxu0
    %v197 = vadd.f32 0.0, %v196
    %v198 = vpop.f32.mrf.mxu0
    %v199 = vadd.f32 0.0, %v198
    %200 = vmatmul.bf16.gmra.mxu0 %v112
    %v201 = vpop.f32.mrf.mxu0
    %v202 = vadd.f32 0.0, %v201
    %v203 = vpop.f32.mrf.mxu0
    %v204 = vadd.f32 0.0, %v203
    %205 = vmatmul.bf16.gmra.mxu0 %v113
    %v206 = vpop.f32.mrf.mxu0
    %v207 = vadd.f32 0.0, %v206
    %v208 = vpop.f32.mrf.mxu0
    %v209 = vadd.f32 0.0, %v208
    %210 = vmatmul.bf16.gmra.mxu0 %v114
    %v211 = vpop.f32.mrf.mxu0
    %v212 = vadd.f32 0.0, %v211
    %v213 = vpop.f32.mrf.mxu0
    %v214 = vadd.f32 0.0, %v213
    %215 = vmatmul.bf16.gmra.mxu0 %v115
    %v216 = vpop.f32.mrf.mxu0
    %v217 = vadd.f32 0.0, %v216
    %v218 = vpop.f32.mrf.mxu0
    %v219 = vadd.f32 0.0, %v218
    %220 = vdwg.mxu0
    %v221 = vpack.c.bf16 %v182, %v182
    %v222 = vpack.c.bf16 %v184, %v184
    %v223 = vpack.c.bf16 %v187, %v187
    %v224 = vpack.c.bf16 %v189, %v189
    %v225 = vpack.c.bf16 %v192, %v192
    %v226 = vpack.c.bf16 %v194, %v194
    %v227 = vpack.c.bf16 %v197, %v197
    %v228 = vpack.c.bf16 %v199, %v199
    %v229 = vpack.c.bf16 %v202, %v202
    %v230 = vpack.c.bf16 %v204, %v204
    %v231 = vpack.c.bf16 %v207, %v207
    %v232 = vpack.c.bf16 %v209, %v209
    %v233 = vpack.c.bf16 %v212, %v212
    %v234 = vpack.c.bf16 %v214, %v214
    %v235 = vpack.c.bf16 %v217, %v217
    %v236 = vpack.c.bf16 %v219, %v219
    %237 = vst [vmem:[#allocation7] sm:$0xf] %v221
    %238 = vst [vmem:[#allocation7 + $0x4] sm:$0xf] %v222
    %239 = vst [vmem:[#allocation7 + $0x8] sm:$0xf] %v223
    %240 = vst [vmem:[#allocation7 + $0xc] sm:$0xf] %v224
    %241 = vst [vmem:[#allocation7 + $0x10] sm:$0xf] %v225
    %242 = vst [vmem:[#allocation7 + $0x14] sm:$0xf] %v226
    %243 = vst [vmem:[#allocation7 + $0x18] sm:$0xf] %v227
    %244 = vst [vmem:[#allocation7 + $0x1c] sm:$0xf] %v228
    %245 = vst [vmem:[#allocation7 + $0x20] sm:$0xf] %v229
    %246 = vst [vmem:[#allocation7 + $0x24] sm:$0xf] %v230
    %247 = vst [vmem:[#allocation7 + $0x28] sm:$0xf] %v231
    %248 = vst [vmem:[#allocation7 + $0x2c] sm:$0xf] %v232
    %249 = vst [vmem:[#allocation7 + $0x30] sm:$0xf] %v233
    %250 = vst [vmem:[#allocation7 + $0x34] sm:$0xf] %v234
    %251 = vst [vmem:[#allocation7 + $0x38] sm:$0xf] %v235
    %252 = vst [vmem:[#allocation7 + $0x3c] sm:$0xf] %v236
    // Predicated region
    $region18: #{tpu_custom_call.1} parent=1 // pred_check
      _
    $region19: #{tpu_custom_call.1} parent=1 // pred_check_branch
      %254 = sbr.rel (0) target = $region21
    $region20: #{tpu_custom_call.1} parent=1 // pred_region
      %256 = vsyncadd [#allocation4], 0
      %s257 = sshll.u32 [#allocation7], 4
      %s258 = int_to_ptr.vmem [resolvable:$true] %s257
      %s259 = sshll.u32 %s2, 4
      %s260 = int_to_ptr.hbm [resolvable:$true] %s259
      %265 = dma.vmem_to_hbm [thread:$0]  %s258, 1024, %s260, [#allocation4], 64, 64, 4
    $region21: #{tpu_custom_call.1} parent=1 // pred_fallthru
      _
    // Predicated region
    $region22: #{tpu_custom_call.1} parent=1 // pred_check
      _
    $region23: #{tpu_custom_call.1} parent=1 // pred_check_branch
      %267 = sbr.rel (0) target = $region25
    $region24: #{tpu_custom_call.1} parent=1 // pred_region
      %269 = dma.done [#allocation4], 1024
    $region25: #{tpu_custom_call.1} parent=1 // pred_fallthru
      _
    %270 = vsyncpa [#allocation3], 1
    %271 = vsyncpa [#allocation6], 1
    %272 = vsyncpa [#allocation4], 1

</llo_original>
